<compile_context>
chip_gen: v6e
topology: v6e:2x2x1
jax: 0.10.0
libtpu: 0.0.40
codegen_flags: <defaults>
</compile_context>

<pallas_src>
import functools

import jax
import jax.numpy as jnp
from jax.experimental import pallas as pl
from jax.experimental.pallas import tpu as pltpu


def _dice_sums_kernel(labels_ref, pred_ref, out_ref,
                      acc_inter, acc_psq, acc_tsq):
    """Per (batch, chunk) accumulates, over spatial tiles j:
         intersection = sum_spatial(pred * onehot(label))
         pred_sq      = sum_spatial(pred^2)
         true_sq      = sum_spatial(onehot(label))      (onehot^2 == onehot)
       Grid: (batch [parallel], chunk [parallel], spatial tile [reduction])."""
    j = pl.program_id(2)

    @pl.when(j == 0)
    def _init():
        acc_inter[...] = jnp.zeros_like(acc_inter)
        acc_psq[...] = jnp.zeros_like(acc_psq)
        acc_tsq[...] = jnp.zeros_like(acc_tsq)

    pred = pred_ref[...].astype(jnp.float32)     # (1, C, TN); upcast in-kernel
    labels = labels_ref[...]                     # (1, 1, TN) int32
    num_class = pred.shape[1]

    # Implicit one-hot: tiny (1, C, 1) iota; broadcast happens in the compare.
    # Padded labels (-1) and out-of-range labels match no class (same as
    # jax.nn.one_hot / reference semantics).
    class_ids = jax.lax.broadcasted_iota(jnp.int32, (1, num_class, 1), 1)
    onehot = (labels == class_ids).astype(jnp.float32)      # (1, C, TN)

    # Lane-dense accumulation: pure element-wise VPU work per tile, no
    # per-step XLU reductions or 1-lane masked stores.
    acc_inter[...] += pred * onehot
    acc_psq[...] += pred * pred
    # f32 count is exact up to 2^24 voxels per class per (batch, chunk).
    acc_tsq[...] += onehot

    @pl.when(j == pl.num_programs(2) - 1)
    def _finalize():
        # Single cross-lane reduce per (batch, chunk); C stays on sublanes so
        # no relayout is needed.  Packed output block: (1, 1, C, 3).
        out_ref[:, :, :, 0:1] = jnp.sum(acc_inter[...], axis=2, keepdims=True)[None]
        out_ref[:, :, :, 1:2] = jnp.sum(acc_psq[...], axis=2, keepdims=True)[None]
        out_ref[:, :, :, 2:3] = jnp.sum(acc_tsq[...], axis=2, keepdims=True)[None]


def _round_up(x, m):
    return ((x + m - 1) // m) * m


@functools.partial(jax.jit, static_argnames=("num_class", "tile_n"))
def dice_loss(y_pred, y_true, num_class=36, tile_n=8192):
    """y_pred: [B, C, H, W, D] float scores ("one-hot like"), any float dtype.
       y_true: [B, 1, H, W, D] integer labels in [0, num_class)."""
    B, C, H, W, D = y_pred.shape
    assert C == num_class
    N = H * W * D

    # Stream pred in its native storage dtype (bf16 stays bf16 -> half the
    # HBM traffic of an f32 copy); labels cast only if needed (tiny anyway).
    pred = y_pred.reshape(B, C, N)
    labels = y_true.reshape(B, 1, N)
    if labels.dtype != jnp.int32:
        labels = labels.astype(jnp.int32)

    # Spatial (lane) tile: large, 512-aligned, capped by tile_n so that
    # 2x double-buffered pred tiles + 3 full-width accumulators fit VMEM on
    # every generation (v5e 16 MiB default scoped, v7x 64 MiB physical).
    tile_n = _round_up(tile_n, 512)
    TN = min(tile_n, _round_up(N, 512))
    n_tiles_total = _round_up(N, TN) // TN

    # Give v7x's second TensorCore a parallel axis even when B == 1.
    chunks = 2 if (B < 2 and n_tiles_total >= 2) else 1
    tiles_per_chunk = _round_up(n_tiles_total, chunks) // chunks
    n_pad = chunks * tiles_per_chunk * TN

    if n_pad != N:
        # Pred padded with 0 and labels with -1 -> padded tail contributes 0
        # to all three sums.  Keeps the pipeline shape independent of N.
        pred = jnp.pad(pred, ((0, 0), (0, 0), (0, n_pad - N)))
        labels = jnp.pad(labels, ((0, 0), (0, 0), (0, n_pad - N)),
                         constant_values=-1)

    cost = pl.CostEstimate(
        flops=7 * B * C * n_pad,
        transcendentals=0,
        bytes_accessed=(pred.size * pred.dtype.itemsize
                        + labels.size * labels.dtype.itemsize
                        + B * chunks * C * 3 * 4),
    )

    spatial_idx = lambda b, c, j: (b, 0, c * tiles_per_chunk + j)

    sums = pl.pallas_call(
        _dice_sums_kernel,
        out_shape=jax.ShapeDtypeStruct((B, chunks, C, 3), jnp.float32),
        grid_spec=pltpu.PrefetchScalarGridSpec(
            num_scalar_prefetch=0,
            grid=(B, chunks, tiles_per_chunk),
            in_specs=[
                pl.BlockSpec((1, 1, TN), spatial_idx),    # labels
                pl.BlockSpec((1, C, TN), spatial_idx),    # pred (native dtype)
            ],
            out_specs=pl.BlockSpec((1, 1, C, 3), lambda b, c, j: (b, c, 0, 0)),
            scratch_shapes=[
                pltpu.VMEM((1, C, TN), jnp.float32),      # acc intersection
                pltpu.VMEM((1, C, TN), jnp.float32),      # acc pred^2
                pltpu.VMEM((1, C, TN), jnp.float32),      # acc onehot count
            ],
        ),
        compiler_params=pltpu.CompilerParams(
            dimension_semantics=("parallel", "parallel", "arbitrary"),
            vmem_limit_bytes=32 * 1024 * 1024,
        ),
        cost_estimate=cost,
    )(labels, pred)

    # Tiny epilogue in plain JAX: combine chunk partials, dice ratio, mean.
    per_bc = jnp.sum(sums, axis=1)            # (B, C, 3)
    inter = per_bc[..., 0]
    union = per_bc[..., 1] + per_bc[..., 2]
    dsc = 2.0 * inter / (union + 1e-05)
    return 1.0 - jnp.mean(dsc)


def _dice_loss_ref(y_pred, y_true, num_class=36):
    y_pred = y_pred.astype(jnp.float32)
    onehot = jax.nn.one_hot(y_true.astype(jnp.int32), num_class, dtype=jnp.float32)
    onehot = jnp.squeeze(onehot, 1)                       # (B, H, W, D, C)
    onehot = jnp.transpose(onehot, (0, 4, 1, 2, 3))       # (B, C, H, W, D)
    inter = jnp.sum(y_pred * onehot, axis=(2, 3, 4))
    union = jnp.sum(y_pred ** 2, axis=(2, 3, 4)) + jnp.sum(onehot ** 2, axis=(2, 3, 4))
    dsc = 2.0 * inter / (union + 1e-05)
    return 1.0 - jnp.mean(dsc)


if __name__ == "__main__":
    num_class = 36
    key = jax.random.PRNGKey(0)
    k1, k2, k3, k4 = jax.random.split(key, 4)

    # Test 1: f32 pred, B=2, N divides the tile (no padding, chunks=1).
    B, H, W, D = 2, 8, 8, 8
    y_pred = jax.random.uniform(k1, (B, num_class, H, W, D), dtype=jnp.float32)
    y_true = jax.random.randint(k2, (B, 1, H, W, D), 0, num_class, dtype=jnp.int32)
    loss = jax.block_until_ready(dice_loss(y_pred, y_true, num_class=num_class))
    ref = _dice_loss_ref(y_pred, y_true, num_class=num_class)
    assert jnp.abs(loss - ref) < 1e-4, (loss, ref)

    # Test 2: bf16 pred, B=1, N=1000 — exercises native-dtype streaming,
    # spatial padding, and the 2-chunk parallel split (second TensorCore).
    B2, H2, W2, D2 = 1, 10, 10, 10
    y_pred2 = jax.random.uniform(k3, (B2, num_class, H2, W2, D2)).astype(jnp.bfloat16)
    y_true2 = jax.random.randint(k4, (B2, 1, H2, W2, D2), 0, num_class, dtype=jnp.int32)
    loss2 = jax.block_until_ready(
        dice_loss(y_pred2, y_true2, num_class=num_class, tile_n=512))
    ref2 = _dice_loss_ref(y_pred2, y_true2, num_class=num_class)
    assert jnp.abs(loss2 - ref2) < 1e-3, (loss2, ref2)

    print("KERNEL_OK")
</pallas_src>

<mosaic_0001>
module attributes {stable_mosaic.version = 11 : i64} {
  func.func @_dice_sums_kernel(%arg0: i32, %arg1: i32, %arg2: i32, %arg3: memref<1x1x512xi32, #tpu.memory_space<vmem>>, %arg4: memref<1x36x512xf32, #tpu.memory_space<vmem>>, %arg5: memref<1x1x36x3xf32, #tpu.memory_space<vmem>>, %arg6: memref<1x36x512xf32, #tpu.memory_space<vmem>>, %arg7: memref<1x36x512xf32, #tpu.memory_space<vmem>>, %arg8: memref<1x36x512xf32, #tpu.memory_space<vmem>>) attributes {dimension_semantics = [#tpu.dimension_semantics<parallel>, #tpu.dimension_semantics<parallel>, #tpu.dimension_semantics<arbitrary>], iteration_bounds = array<i64: 2, 1, 1>, scalar_prefetch = 0 : i64, scratch_operands = 3 : i64, tpu.core_type = #tpu.core_type<tc>, window_params = [{transform_indices = @transform_0, window_bounds = array<i64: 1, 1, 512>}, {transform_indices = @transform_1, window_bounds = array<i64: 1, 36, 512>}, {transform_indices = @transform_2, window_bounds = array<i64: 1, 1, 36, 3>}]} {
    %c0_i32 = arith.constant 0 : i32
    %0 = arith.cmpi eq, %arg2, %c0_i32 : i32
    %1 = arith.extui %0 : i1 to i32
    %c0_i32_0 = arith.constant 0 : i32
    %2 = arith.cmpi ne, %1, %c0_i32_0 : i32
    scf.if %2 {
      %cst = arith.constant 0.000000e+00 : f32
      %25 = vector.broadcast %cst : f32 to vector<1x36x512xf32>
      %c0_26 = arith.constant 0 : index
      %c0_27 = arith.constant 0 : index
      %c0_28 = arith.constant 0 : index
      %26 = vector.load %arg6[%c0_26, %c0_27, %c0_28] : memref<1x36x512xf32, #tpu.memory_space<vmem>>, vector<1x36x512xf32>
      tpu.vector_store %arg6[%c0_26, %c0_27, %c0_28], %25 {strides = array<i32>} : memref<1x36x512xf32, #tpu.memory_space<vmem>>, vector<1x36x512xf32>,
      %cst_29 = arith.constant 0.000000e+00 : f32
      %27 = vector.broadcast %cst_29 : f32 to vector<1x36x512xf32>
      %c0_30 = arith.constant 0 : index
      %c0_31 = arith.constant 0 : index
      %c0_32 = arith.constant 0 : index
      %28 = vector.load %arg7[%c0_30, %c0_31, %c0_32] : memref<1x36x512xf32, #tpu.memory_space<vmem>>, vector<1x36x512xf32>
      tpu.vector_store %arg7[%c0_30, %c0_31, %c0_32], %27 {strides = array<i32>} : memref<1x36x512xf32, #tpu.memory_space<vmem>>, vector<1x36x512xf32>,
      %cst_33 = arith.constant 0.000000e+00 : f32
      %29 = vector.broadcast %cst_33 : f32 to vector<1x36x512xf32>
      %c0_34 = arith.constant 0 : index
      %c0_35 = arith.constant 0 : index
      %c0_36 = arith.constant 0 : index
      %30 = vector.load %arg8[%c0_34, %c0_35, %c0_36] : memref<1x36x512xf32, #tpu.memory_space<vmem>>, vector<1x36x512xf32>
      tpu.vector_store %arg8[%c0_34, %c0_35, %c0_36], %29 {strides = array<i32>} : memref<1x36x512xf32, #tpu.memory_space<vmem>>, vector<1x36x512xf32>,
    } else {
    }
    %c0 = arith.constant 0 : index
    %c0_1 = arith.constant 0 : index
    %c0_2 = arith.constant 0 : index
    %3 = vector.load %arg4[%c0, %c0_1, %c0_2] : memref<1x36x512xf32, #tpu.memory_space<vmem>>, vector<1x36x512xf32>
    %c0_3 = arith.constant 0 : index
    %c0_4 = arith.constant 0 : index
    %c0_5 = arith.constant 0 : index
    %4 = vector.load %arg3[%c0_3, %c0_4, %c0_5] : memref<1x1x512xi32, #tpu.memory_space<vmem>>, vector<1x1x512xi32>
    %5 = tpu.iota {dimensions = array<i32: 1>} : vector<1x36x1xi32>
    %6 = vector.broadcast %4 : vector<1x1x512xi32> to vector<1x36x512xi32>
    %7 = vector.broadcast %5 : vector<1x36x1xi32> to vector<1x36x512xi32>
    %8 = arith.cmpi eq, %6, %7 : vector<1x36x512xi32>
    %9 = arith.extui %8 : vector<1x36x512xi1> to vector<1x36x512xi32>
    %10 = arith.sitofp %9 : vector<1x36x512xi32> to vector<1x36x512xf32>
    %c0_6 = arith.constant 0 : index
    %c0_7 = arith.constant 0 : index
    %c0_8 = arith.constant 0 : index
    %11 = vector.load %arg6[%c0_6, %c0_7, %c0_8] : memref<1x36x512xf32, #tpu.memory_space<vmem>>, vector<1x36x512xf32>
    %12 = arith.mulf %3, %10 : vector<1x36x512xf32>
    %13 = arith.addf %11, %12 : vector<1x36x512xf32>
    %c0_9 = arith.constant 0 : index
    %c0_10 = arith.constant 0 : index
    %c0_11 = arith.constant 0 : index
    %14 = vector.load %arg6[%c0_9, %c0_10, %c0_11] : memref<1x36x512xf32, #tpu.memory_space<vmem>>, vector<1x36x512xf32>
    tpu.vector_store %arg6[%c0_9, %c0_10, %c0_11], %13 {strides = array<i32>} : memref<1x36x512xf32, #tpu.memory_space<vmem>>, vector<1x36x512xf32>,
    %c0_12 = arith.constant 0 : index
    %c0_13 = arith.constant 0 : index
    %c0_14 = arith.constant 0 : index
    %15 = vector.load %arg7[%c0_12, %c0_13, %c0_14] : memref<1x36x512xf32, #tpu.memory_space<vmem>>, vector<1x36x512xf32>
    %16 = arith.mulf %3, %3 : vector<1x36x512xf32>
    %17 = arith.addf %15, %16 : vector<1x36x512xf32>
    %c0_15 = arith.constant 0 : index
    %c0_16 = arith.constant 0 : index
    %c0_17 = arith.constant 0 : index
    %18 = vector.load %arg7[%c0_15, %c0_16, %c0_17] : memref<1x36x512xf32, #tpu.memory_space<vmem>>, vector<1x36x512xf32>
    tpu.vector_store %arg7[%c0_15, %c0_16, %c0_17], %17 {strides = array<i32>} : memref<1x36x512xf32, #tpu.memory_space<vmem>>, vector<1x36x512xf32>,
    %c0_18 = arith.constant 0 : index
    %c0_19 = arith.constant 0 : index
    %c0_20 = arith.constant 0 : index
    %19 = vector.load %arg8[%c0_18, %c0_19, %c0_20] : memref<1x36x512xf32, #tpu.memory_space<vmem>>, vector<1x36x512xf32>
    %20 = arith.addf %19, %10 : vector<1x36x512xf32>
    %c0_21 = arith.constant 0 : index
    %c0_22 = arith.constant 0 : index
    %c0_23 = arith.constant 0 : index
    %21 = vector.load %arg8[%c0_21, %c0_22, %c0_23] : memref<1x36x512xf32, #tpu.memory_space<vmem>>, vector<1x36x512xf32>
    tpu.vector_store %arg8[%c0_21, %c0_22, %c0_23], %20 {strides = array<i32>} : memref<1x36x512xf32, #tpu.memory_space<vmem>>, vector<1x36x512xf32>,
    %c0_i32_24 = arith.constant 0 : i32
    %22 = arith.cmpi eq, %arg2, %c0_i32_24 : i32
    %23 = arith.extui %22 : i1 to i32
    %c0_i32_25 = arith.constant 0 : i32
    %24 = arith.cmpi ne, %23, %c0_i32_25 : i32
    scf.if %24 {
      %c0_26 = arith.constant 0 : index
      %c0_27 = arith.constant 0 : index
      %c0_28 = arith.constant 0 : index
      %25 = vector.load %arg6[%c0_26, %c0_27, %c0_28] : memref<1x36x512xf32, #tpu.memory_space<vmem>>, vector<1x36x512xf32>
      %cst = arith.constant dense<0.000000e+00> : vector<1x36xf32>
      %26 = vector.multi_reduction <add>, %25, %cst [2] : vector<1x36x512xf32> to vector<1x36xf32>
      %27 = vector.shape_cast %26 : vector<1x36xf32> to vector<1x36x1xf32>
      %28 = vector.shape_cast %27 : vector<1x36x1xf32> to vector<1x1x36x1xf32>
      %c0_29 = arith.constant 0 : index
      %c0_30 = arith.constant 0 : index
      %c0_31 = arith.constant 0 : index
      %c0_32 = arith.constant 0 : index
      %29 = vector.load %arg5[%c0_29, %c0_30, %c0_31, %c0_32] : memref<1x1x36x3xf32, #tpu.memory_space<vmem>>, vector<1x1x36x1xf32>
      tpu.vector_store %arg5[%c0_29, %c0_30, %c0_31, %c0_32], %28 {strides = array<i32>} : memref<1x1x36x3xf32, #tpu.memory_space<vmem>>, vector<1x1x36x1xf32>,
      %c0_33 = arith.constant 0 : index
      %c0_34 = arith.constant 0 : index
      %c0_35 = arith.constant 0 : index
      %30 = vector.load %arg7[%c0_33, %c0_34, %c0_35] : memref<1x36x512xf32, #tpu.memory_space<vmem>>, vector<1x36x512xf32>
      %cst_36 = arith.constant dense<0.000000e+00> : vector<1x36xf32>
      %31 = vector.multi_reduction <add>, %30, %cst_36 [2] : vector<1x36x512xf32> to vector<1x36xf32>
      %32 = vector.shape_cast %31 : vector<1x36xf32> to vector<1x36x1xf32>
      %33 = vector.shape_cast %32 : vector<1x36x1xf32> to vector<1x1x36x1xf32>
      %c0_37 = arith.constant 0 : index
      %c0_38 = arith.constant 0 : index
      %c0_39 = arith.constant 0 : index
      %c1 = arith.constant 1 : index
      %34 = vector.load %arg5[%c0_37, %c0_38, %c0_39, %c1] : memref<1x1x36x3xf32, #tpu.memory_space<vmem>>, vector<1x1x36x1xf32>
      tpu.vector_store %arg5[%c0_37, %c0_38, %c0_39, %c1], %33 {strides = array<i32>} : memref<1x1x36x3xf32, #tpu.memory_space<vmem>>, vector<1x1x36x1xf32>,
      %c0_40 = arith.constant 0 : index
      %c0_41 = arith.constant 0 : index
      %c0_42 = arith.constant 0 : index
      %35 = vector.load %arg8[%c0_40, %c0_41, %c0_42] : memref<1x36x512xf32, #tpu.memory_space<vmem>>, vector<1x36x512xf32>
      %cst_43 = arith.constant dense<0.000000e+00> : vector<1x36xf32>
      %36 = vector.multi_reduction <add>, %35, %cst_43 [2] : vector<1x36x512xf32> to vector<1x36xf32>
      %37 = vector.shape_cast %36 : vector<1x36xf32> to vector<1x36x1xf32>
      %38 = vector.shape_cast %37 : vector<1x36x1xf32> to vector<1x1x36x1xf32>
      %c0_44 = arith.constant 0 : index
      %c0_45 = arith.constant 0 : index
      %c0_46 = arith.constant 0 : index
      %c2 = arith.constant 2 : index
      %39 = vector.load %arg5[%c0_44, %c0_45, %c0_46, %c2] : memref<1x1x36x3xf32, #tpu.memory_space<vmem>>, vector<1x1x36x1xf32>
      tpu.vector_store %arg5[%c0_44, %c0_45, %c0_46, %c2], %38 {strides = array<i32>} : memref<1x1x36x3xf32, #tpu.memory_space<vmem>>, vector<1x1x36x1xf32>,
    } else {
    }
    return
  }
  func.func @transform_0(%arg0: i32, %arg1: i32, %arg2: i32) -> (i32, i32, i32) {
    %c1_i32 = arith.constant 1 : i32
    %0 = arith.muli %arg1, %c1_i32 : i32
    %1 = arith.addi %0, %arg2 : i32
    %c0_i32 = arith.constant 0 : i32
    %c0_i32_0 = arith.constant 0 : i32
    return %arg0, %c0_i32, %1 : i32, i32, i32
  }
  func.func @transform_1(%arg0: i32, %arg1: i32, %arg2: i32) -> (i32, i32, i32) {
    %c1_i32 = arith.constant 1 : i32
    %0 = arith.muli %arg1, %c1_i32 : i32
    %1 = arith.addi %0, %arg2 : i32
    %c0_i32 = arith.constant 0 : i32
    %c0_i32_0 = arith.constant 0 : i32
    return %arg0, %c0_i32, %1 : i32, i32, i32
  }
  func.func @transform_2(%arg0: i32, %arg1: i32, %arg2: i32) -> (i32, i32, i32, i32) {
    %c0_i32 = arith.constant 0 : i32
    %c0_i32_0 = arith.constant 0 : i32
    %c0_i32_1 = arith.constant 0 : i32
    return %arg0, %arg1, %c0_i32, %c0_i32_0 : i32, i32, i32, i32
  }
}

</mosaic_0001>

<llo_original>
// kernel: dice_loss.1
$region0: #{dice_loss.1}
  #allocation0 [shape = 'u32[]', space=smem, size = 0x4, offset = 0x4, fixed_abs, tag = 'smem constant byte address 0x4 - core index']
  #allocation1 [shape = 'u32[144,128]{1,0:T(1,128)}', space=vmem, size = 0x12000, scoped, tag = 'internal scratch']
  #allocation2 [shape = 'f32[1,36,512]{2,1,0:T(8,128)}', space=vmem, size = 0x14000, scoped, tag = 'scratch operand']
  #allocation3 [shape = 'f32[1,36,512]{2,1,0:T(8,128)}', space=vmem, size = 0x14000, scoped, tag = 'scratch operand']
  #allocation4 [shape = 'f32[1,36,512]{2,1,0:T(8,128)}', space=vmem, size = 0x14000, scoped, tag = 'scratch operand']
  %s0 = inlined_call_operand.vmem [shape: s32[2,1,512], index: 0, kind: input, shape index: {}]
  %s1 = inlined_call_operand.vmem [shape: f32[2,36,512], index: 1, kind: input, shape index: {}]
  %s2 = inlined_call_operand.vmem [shape: f32[2,1,36,3], index: 2, kind: output, shape index: {}]
  %s3 = sld [smem:[#allocation0]]
  $region49: #{dice_loss.1} parent=0
    _
  %s5 = ssub.s32 1, %s3
  %s6 = scalar_select 0, %s5, %s3
  loop: start=0, step=1, limit=4
  $region2: #{dice_loss.1} parent=0 // loop_pre_header
    _
  $region3: #{dice_loss.1} parent=0 // loop_header
    %s8 = sphi 0, %s12
    %p9 = scmp.ge.s32.totalorder %s8, 4
    %s15 = sphi 0, %s34
    %s16 = sphi 0, %s30
    %s17 = sphi 0, %s26
    %s18 = sphi 0, %s15
    %s19 = sphi 0, %s16
    %s20 = sphi 0, %s17
    %s21 = sphi 0, %s18
    %s22 = sphi 0, %s19
    %s23 = sphi 0, %s20
    %s41 = sphi 0, %s43
    %s44 = sphi 0, %s41
    %s45 = sphi 0, %s44
    %s61 = sphi 0, %s45
    %s71 = sphi 0, %s73
    %s74 = sphi 0, %s71
    %s75 = sphi 0, %s74
    %s91 = sphi 0, %s75
    %s99 = sphi 0, %s101
    %s102 = sphi 0, %s99
    %s103 = sphi 0, %s102
    %s119 = sphi 0, %s103
  $region4: #{dice_loss.1} parent=0 // loop_header_branch
    %11 = sbr.rel (%p9) target = $region8
  $region5: #{dice_loss.1} parent=0 // loop_body
    %s13 = ssub.s32 %s8, 1
    %s14 = ssub.s32 %s8, 2
    %s24 = sadd.s32 1, %s17
    %p25 = scmp.ge.s32.totalorder %s24, 1
    %s26 = scalar_select %p25, 0, %s24
    %s27 = sadd.s32 1, %s16
    %s28 = scalar_select %p25, %s27, %s16
    %p29 = scmp.ge.s32.totalorder %s28, 1
    %s30 = scalar_select %p29, 0, %s28
    %s31 = sadd.s32 1, %s15
    %s32 = scalar_select %p29, %s31, %s15
    %p33 = scmp.ge.s32.totalorder %s32, 2
    %s34 = scalar_select %p33, 0, %s32
    %s35 = sadd.s32 %s16, %s17
    %s36 = sadd.s32 %s30, %s26
    %s37 = ssub.s32 %s15, %s34
    %s38 = ssub.s32 %s35, %s36
    %s39 = sor.u32 %s37, %s38
    %p40 = scmp.eq.s32.totalorder %s39, 0
    %s42 = sadd.s32 %s41, 1
    %s43 = scalar_select %p40, %s41, %s42
    %p46 = pneg %p40
    %p47 = scmp.eq.s32.totalorder %s8, 1
    %p48 = por %p46, %p47
    %p49 = scmp.ne.s32.totalorder %s41, %s44
    %p50 = scmp.eq.s32.totalorder %s8, 0
    %p51 = por %p49, %p50
    %p52 = scmp.ne.s32.totalorder %s41, %s44
    %p53 = scmp.eq.s32.totalorder %s13, 1
    %p54 = por %p52, %p53
    %p55 = scmp.ne.s32.totalorder %s44, %s45
    %p56 = scmp.eq.s32.totalorder %s13, 0
    %p57 = por %p55, %p56
    %p58 = scmp.ne.s32.totalorder %s44, %s45
    %p59 = scmp.eq.s32.totalorder %s14, 1
    %p60 = por %p58, %p59
    %p62 = scmp.ne.s32.totalorder %s45, %s61
    %p63 = scmp.eq.s32.totalorder %s14, 0
    %p64 = por %p62, %p63
    %s65 = sadd.s32 %s16, %s17
    %s66 = sadd.s32 %s30, %s26
    %s67 = ssub.s32 %s15, %s34
    %s68 = ssub.s32 %s65, %s66
    %s69 = sor.u32 %s67, %s68
    %p70 = scmp.eq.s32.totalorder %s69, 0
    %s72 = sadd.s32 %s71, 1
    %s73 = scalar_select %p70, %s71, %s72
    %p76 = pneg %p70
    %p77 = scmp.eq.s32.totalorder %s8, 1
    %p78 = por %p76, %p77
    %p79 = scmp.ne.s32.totalorder %s71, %s74
    %p80 = scmp.eq.s32.totalorder %s8, 0
    %p81 = por %p79, %p80
    %p82 = scmp.ne.s32.totalorder %s71, %s74
    %p83 = scmp.eq.s32.totalorder %s13, 1
    %p84 = por %p82, %p83
    %p85 = scmp.ne.s32.totalorder %s74, %s75
    %p86 = scmp.eq.s32.totalorder %s13, 0
    %p87 = por %p85, %p86
    %p88 = scmp.ne.s32.totalorder %s74, %s75
    %p89 = scmp.eq.s32.totalorder %s14, 1
    %p90 = por %p88, %p89
    %p92 = scmp.ne.s32.totalorder %s75, %s91
    %p93 = scmp.eq.s32.totalorder %s14, 0
    %p94 = por %p92, %p93
    %s95 = ssub.s32 %s15, %s34
    %s96 = ssub.s32 %s16, %s30
    %s97 = sor.u32 %s95, %s96
    %p98 = scmp.eq.s32.totalorder %s97, 0
    %s100 = sadd.s32 %s99, 1
    %s101 = scalar_select %p98, %s99, %s100
    %p104 = pneg %p98
    %p105 = scmp.eq.s32.totalorder %s8, 1
    %p106 = por %p104, %p105
    %p107 = scmp.ne.s32.totalorder %s99, %s102
    %p108 = scmp.eq.s32.totalorder %s8, 0
    %p109 = por %p107, %p108
    %p110 = scmp.ne.s32.totalorder %s99, %s102
    %p111 = scmp.eq.s32.totalorder %s13, 1
    %p112 = por %p110, %p111
    %p113 = scmp.ne.s32.totalorder %s102, %s103
    %p114 = scmp.eq.s32.totalorder %s13, 0
    %p115 = por %p113, %p114
    %p116 = scmp.ne.s32.totalorder %s102, %s103
    %p117 = scmp.eq.s32.totalorder %s14, 1
    %p118 = por %p116, %p117
    %p120 = scmp.ne.s32.totalorder %s103, %s119
    %p121 = scmp.eq.s32.totalorder %s14, 0
    %p122 = por %p120, %p121
    %p123 = scmp.le.s32.totalorder 1, %s8
    %p124 = scmp.lt.s32.totalorder %s8, 3
    %p125 = pnand %p123, %p124
    %p126 = pneg %p125
    // Predicated region
    $region9: #{dice_loss.1} parent=5 // pred_check
      _
    $region10: #{dice_loss.1} parent=5 // pred_check_branch
      %128 = sbr.rel (%p125) target = $region12
    $region11: #{dice_loss.1} parent=5 // pred_region
      %s129 = ssub.s32 %s8, 1
    $region12: #{dice_loss.1} parent=5 // pred_fallthru
      _
    %p130 = scmp.lt.s32.totalorder %s8, 2
    // Predicated region
    $region13: #{dice_loss.1} parent=5 // pred_check
      %p131 = pneg %p130
    $region14: #{dice_loss.1} parent=5 // pred_check_branch
      %133 = sbr.rel (%p131) target = $region16
    $region15: #{dice_loss.1} parent=5 // pred_region
      // Predicated region
      $region17: #{dice_loss.1} parent=15 // pred_check
        %p134 = pneg %p51
      $region18: #{dice_loss.1} parent=15 // pred_check_branch
        %136 = sbr.rel (%p134) target = $region20
      $region19: #{dice_loss.1} parent=15 // pred_region
        %s137 = sadd.s32 %s16, %s17
        %s138 = smul.u32 4, %s137
        %p139 = scmp.lt.s32.totalorder %s15, 1
        %s140 = scalar_select %p139, %s15, 1
        %p141 = scmp.lt.s32.totalorder %s138, 3
        %s142 = scalar_select %p141, %s138, 3
        %s143 = smul.addr %s140, 4
        %s144 = sadd.s32 %s142, %s143
        %s145 = scalar_lea.vmem %s0, %s144
        %s146 = sadd.s32 %s16, %s17
        %s147 = smul.u32 4, %s146
      $region20: #{dice_loss.1} parent=15 // pred_fallthru
        _
      // Predicated region
      $region21: #{dice_loss.1} parent=15 // pred_check
        %p148 = pneg %p81
      $region22: #{dice_loss.1} parent=15 // pred_check_branch
        %150 = sbr.rel (%p148) target = $region24
      $region23: #{dice_loss.1} parent=15 // pred_region
        %s151 = sadd.s32 %s16, %s17
        %s152 = smul.u32 4, %s151
        %p153 = scmp.lt.s32.totalorder %s15, 1
        %s154 = scalar_select %p153, %s15, 1
        %p155 = scmp.lt.s32.totalorder %s152, 3
        %s156 = scalar_select %p155, %s152, 3
        %s157 = smul.addr %s154, 20
        %s158 = sadd.s32 %s156, %s157
        %s159 = smul.addr %s158, 8
        %s160 = scalar_lea.vmem %s1, %s159
        %s161 = sadd.s32 %s16, %s17
        %s162 = smul.u32 4, %s161
      $region24: #{dice_loss.1} parent=15 // pred_fallthru
        _
    $region16: #{dice_loss.1} parent=5 // pred_fallthru
      _
    %p163 = scmp.le.s32.totalorder 1, %s8
    %p164 = scmp.lt.s32.totalorder %s8, 3
    %p165 = pnand %p163, %p164
    %p166 = pneg %p165
    // Predicated region
    $region25: #{dice_loss.1} parent=5 // pred_check
      _
    $region26: #{dice_loss.1} parent=5 // pred_check_branch
      %168 = sbr.rel (%p165) target = $region28
    $region27: #{dice_loss.1} parent=5 // pred_region
      %s169 = ssub.s32 %s8, 1
      %s170 = sadd.s32 %s19, %s20
      %s171 = smul.u32 4, %s170
      %p172 = scmp.lt.s32.totalorder %s18, 1
      %s173 = scalar_select %p172, %s18, 1
      %p174 = scmp.lt.s32.totalorder %s171, 3
      %s175 = scalar_select %p174, %s171, 3
      %s176 = smul.addr %s173, 4
      %s177 = sadd.s32 %s175, %s176
      %s178 = scalar_lea.vmem %s0, %s177
      %p179 = pneg %p57
      %p180 = pneg %p54
      %s181 = sadd.s32 %s19, %s20
      %s182 = smul.u32 4, %s181
      %p183 = scmp.lt.s32.totalorder %s18, 1
      %s184 = scalar_select %p183, %s18, 1
      %p185 = scmp.lt.s32.totalorder %s182, 3
      %s186 = scalar_select %p185, %s182, 3
      %s187 = smul.addr %s184, 20
      %s188 = sadd.s32 %s186, %s187
      %s189 = smul.addr %s188, 8
      %s190 = scalar_lea.vmem %s1, %s189
      %p191 = pneg %p87
      %p192 = pneg %p84
      %p193 = pneg %p115
      %p194 = pneg %p112
      %p195 = scmp.lt.s32.totalorder %s18, 1
      %s196 = scalar_select %p195, %s18, 1
      %p197 = scmp.lt.s32.totalorder %s19, 0
      %s198 = scalar_select %p197, %s19, 0
      %s199 = smul.addr %s198, 5
      %s200 = smul.addr %s196, 5
      %s201 = sadd.s32 %s199, %s200
      %s202 = smul.addr %s201, 8
      %s203 = scalar_lea.vmem %s2, %s202
      %s204 = sadd.s32 %s19, %s20
      %s205 = smul.u32 4, %s204
      %p206 = scmp.lt.s32.totalorder %s18, 1
      %s207 = scalar_select %p206, %s18, 1
      %p208 = scmp.lt.s32.totalorder %s205, 3
      %s209 = scalar_select %p208, %s205, 3
      %s210 = smul.addr %s207, 4
      %s211 = sadd.s32 %s209, %s210
      %s212 = scalar_lea.vmem %s0, %s211
      %s213 = sadd.s32 %s19, %s20
      %s214 = smul.u32 4, %s213
      %s215 = sadd.s32 %s19, %s20
      %s216 = smul.u32 4, %s215
      %p217 = scmp.lt.s32.totalorder %s18, 1
      %s218 = scalar_select %p217, %s18, 1
      %p219 = scmp.lt.s32.totalorder %s216, 3
      %s220 = scalar_select %p219, %s216, 3
      %s221 = smul.addr %s218, 20
      %s222 = sadd.s32 %s220, %s221
      %s223 = smul.addr %s222, 8
      %s224 = scalar_lea.vmem %s1, %s223
      %s225 = sadd.s32 %s19, %s20
      %s226 = smul.u32 4, %s225
      %p227 = scmp.lt.s32.totalorder %s18, 1
      %s228 = scalar_select %p227, %s18, 1
      %p229 = scmp.lt.s32.totalorder %s19, 0
      %s230 = scalar_select %p229, %s19, 0
      %s231 = smul.addr %s230, 5
      %s232 = smul.addr %s228, 5
      %s233 = sadd.s32 %s231, %s232
      %s234 = smul.addr %s233, 8
      %s235 = scalar_lea.vmem %s2, %s234
      %p236 = scmp.eq.s32.totalorder %s20, 0
      // Predicated region
      $region29: #{dice_loss.1} parent=27 // pred_check
        %p237 = pneg %p236
      $region30: #{dice_loss.1} parent=27 // pred_check_branch
        %239 = sbr.rel (%p237) target = $region32
      $region31: #{dice_loss.1} parent=27 // pred_region
        %240 = vst [vmem:[#allocation2] sm:$0xff] 0.0
        %241 = vst [vmem:[#allocation2 + $0x8] sm:$0xff] 0.0
        %242 = vst [vmem:[#allocation2 + $0x10] sm:$0xff] 0.0
        %243 = vst [vmem:[#allocation2 + $0x18] sm:$0xff] 0.0
        %244 = vst [vmem:[#allocation2 + $0x20] sm:$0xff] 0.0
        %245 = vst [vmem:[#allocation2 + $0x28] sm:$0xff] 0.0
        %246 = vst [vmem:[#allocation2 + $0x30] sm:$0xff] 0.0
        %247 = vst [vmem:[#allocation2 + $0x38] sm:$0xff] 0.0
        %248 = vst [vmem:[#allocation2 + $0x40] sm:$0xff] 0.0
        %249 = vst [vmem:[#allocation2 + $0x48] sm:$0xff] 0.0
        %250 = vst [vmem:[#allocation2 + $0x50] sm:$0xff] 0.0
        %251 = vst [vmem:[#allocation2 + $0x58] sm:$0xff] 0.0
        %252 = vst [vmem:[#allocation2 + $0x60] sm:$0xff] 0.0
        %253 = vst [vmem:[#allocation2 + $0x68] sm:$0xff] 0.0
        %254 = vst [vmem:[#allocation2 + $0x70] sm:$0xff] 0.0
        %255 = vst [vmem:[#allocation2 + $0x78] sm:$0xff] 0.0
        %256 = vst [vmem:[#allocation2 + $0x80] sm:$0xf] 0.0
        %257 = vst [vmem:[#allocation2 + $0x88] sm:$0xf] 0.0
        %258 = vst [vmem:[#allocation2 + $0x90] sm:$0xf] 0.0
        %259 = vst [vmem:[#allocation2 + $0x98] sm:$0xf] 0.0
        %260 = vst [vmem:[#allocation3] sm:$0xff] 0.0
        %261 = vst [vmem:[#allocation3 + $0x8] sm:$0xff] 0.0
        %262 = vst [vmem:[#allocation3 + $0x10] sm:$0xff] 0.0
        %263 = vst [vmem:[#allocation3 + $0x18] sm:$0xff] 0.0
        %264 = vst [vmem:[#allocation3 + $0x20] sm:$0xff] 0.0
        %265 = vst [vmem:[#allocation3 + $0x28] sm:$0xff] 0.0
        %266 = vst [vmem:[#allocation3 + $0x30] sm:$0xff] 0.0
        %267 = vst [vmem:[#allocation3 + $0x38] sm:$0xff] 0.0
        %268 = vst [vmem:[#allocation3 + $0x40] sm:$0xff] 0.0
        %269 = vst [vmem:[#allocation3 + $0x48] sm:$0xff] 0.0
        %270 = vst [vmem:[#allocation3 + $0x50] sm:$0xff] 0.0
        %271 = vst [vmem:[#allocation3 + $0x58] sm:$0xff] 0.0
        %272 = vst [vmem:[#allocation3 + $0x60] sm:$0xff] 0.0
        %273 = vst [vmem:[#allocation3 + $0x68] sm:$0xff] 0.0
        %274 = vst [vmem:[#allocation3 + $0x70] sm:$0xff] 0.0
        %275 = vst [vmem:[#allocation3 + $0x78] sm:$0xff] 0.0
        %276 = vst [vmem:[#allocation3 + $0x80] sm:$0xf] 0.0
        %277 = vst [vmem:[#allocation3 + $0x88] sm:$0xf] 0.0
        %278 = vst [vmem:[#allocation3 + $0x90] sm:$0xf] 0.0
        %279 = vst [vmem:[#allocation3 + $0x98] sm:$0xf] 0.0
        %280 = vst [vmem:[#allocation4] sm:$0xff] 0.0
        %281 = vst [vmem:[#allocation4 + $0x8] sm:$0xff] 0.0
        %282 = vst [vmem:[#allocation4 + $0x10] sm:$0xff] 0.0
        %283 = vst [vmem:[#allocation4 + $0x18] sm:$0xff] 0.0
        %284 = vst [vmem:[#allocation4 + $0x20] sm:$0xff] 0.0
        %285 = vst [vmem:[#allocation4 + $0x28] sm:$0xff] 0.0
        %286 = vst [vmem:[#allocation4 + $0x30] sm:$0xff] 0.0
        %287 = vst [vmem:[#allocation4 + $0x38] sm:$0xff] 0.0
        %288 = vst [vmem:[#allocation4 + $0x40] sm:$0xff] 0.0
        %289 = vst [vmem:[#allocation4 + $0x48] sm:$0xff] 0.0
        %290 = vst [vmem:[#allocation4 + $0x50] sm:$0xff] 0.0
        %291 = vst [vmem:[#allocation4 + $0x58] sm:$0xff] 0.0
        %292 = vst [vmem:[#allocation4 + $0x60] sm:$0xff] 0.0
        %293 = vst [vmem:[#allocation4 + $0x68] sm:$0xff] 0.0
        %294 = vst [vmem:[#allocation4 + $0x70] sm:$0xff] 0.0
        %295 = vst [vmem:[#allocation4 + $0x78] sm:$0xff] 0.0
        %296 = vst [vmem:[#allocation4 + $0x80] sm:$0xf] 0.0
        %297 = vst [vmem:[#allocation4 + $0x88] sm:$0xf] 0.0
        %298 = vst [vmem:[#allocation4 + $0x90] sm:$0xf] 0.0
        %299 = vst [vmem:[#allocation4 + $0x98] sm:$0xf] 0.0
      $region32: #{dice_loss.1} parent=27 // pred_fallthru
        _
      %v300 = vld [vmem:[%s224] sm:$0xff]
      %v301 = vld [vmem:[%s224 + $0x8] sm:$0xff]
      %v302 = vld [vmem:[%s224 + $0x10] sm:$0xff]
      %v303 = vld [vmem:[%s224 + $0x18] sm:$0xff]
      %v304 = vld [vmem:[%s224 + $0x20] sm:$0xff]
      %v305 = vld [vmem:[%s224 + $0x28] sm:$0xff]
      %v306 = vld [vmem:[%s224 + $0x30] sm:$0xff]
      %v307 = vld [vmem:[%s224 + $0x38] sm:$0xff]
      %v308 = vld [vmem:[%s224 + $0x40] sm:$0xff]
      %v309 = vld [vmem:[%s224 + $0x48] sm:$0xff]
      %v310 = vld [vmem:[%s224 + $0x50] sm:$0xff]
      %v311 = vld [vmem:[%s224 + $0x58] sm:$0xff]
      %v312 = vld [vmem:[%s224 + $0x60] sm:$0xff]
      %v313 = vld [vmem:[%s224 + $0x68] sm:$0xff]
      %v314 = vld [vmem:[%s224 + $0x70] sm:$0xff]
      %v315 = vld [vmem:[%s224 + $0x78] sm:$0xff]
      %v316 = vld [vmem:[%s224 + $0x80] sm:$0xf]
      %v317 = vld [vmem:[%s224 + $0x88] sm:$0xf]
      %v318 = vld [vmem:[%s224 + $0x90] sm:$0xf]
      %v319 = vld [vmem:[%s224 + $0x98] sm:$0xf]
      %v320 = vld [vmem:[%s212] sm:$0xf]
      %v321 = vlaneseq
      %v322 = vshrl.u32 %v321, 7
      %v323 = vadd.s32 %v322, 8
      %v324 = vadd.s32 %v322, 16
      %v325 = vadd.s32 %v322, 24
      %v326 = vadd.s32 %v322, 32
      %v327 = vlaneseq
      %v328 = vshrl.u32 %v327, 7
      %v329 = vsub.s32 0, %v328
      %v330 = vrot.slane %v320, %v329
      %v331 = vlaneseq
      %v332 = vshrl.u32 %v331, 7
      %v333 = vsub.s32 1, %v332
      %v334 = vrot.slane %v320, %v333
      %v335 = vlaneseq
      %v336 = vshrl.u32 %v335, 7
      %v337 = vsub.s32 2, %v336
      %v338 = vrot.slane %v320, %v337
      %v339 = vlaneseq
      %v340 = vshrl.u32 %v339, 7
      %v341 = vsub.s32 3, %v340
      %v342 = vrot.slane %v320, %v341
      %vm343 = vcmp.eq.s32.totalorder %v330, %v322
      %vm344 = vcmp.eq.s32.totalorder %v334, %v322
      %vm345 = vcmp.eq.s32.totalorder %v338, %v322
      %vm346 = vcmp.eq.s32.totalorder %v342, %v322
      %vm347 = vcmp.eq.s32.totalorder %v330, %v323
      %vm348 = vcmp.eq.s32.totalorder %v334, %v323
      %vm349 = vcmp.eq.s32.totalorder %v338, %v323
      %vm350 = vcmp.eq.s32.totalorder %v342, %v323
      %vm351 = vcmp.eq.s32.totalorder %v330, %v324
      %vm352 = vcmp.eq.s32.totalorder %v334, %v324
      %vm353 = vcmp.eq.s32.totalorder %v338, %v324
      %vm354 = vcmp.eq.s32.totalorder %v342, %v324
      %vm355 = vcmp.eq.s32.totalorder %v330, %v325
      %vm356 = vcmp.eq.s32.totalorder %v334, %v325
      %vm357 = vcmp.eq.s32.totalorder %v338, %v325
      %vm358 = vcmp.eq.s32.totalorder %v342, %v325
      %vm359 = vcmp.eq.s32.totalorder %v330, %v326
      %vm360 = vcmp.eq.s32.totalorder %v334, %v326
      %vm361 = vcmp.eq.s32.totalorder %v338, %v326
      %vm362 = vcmp.eq.s32.totalorder %v342, %v326
      %v363 = vsel %vm343, 1, 0
      %v364 = vsel %vm344, 1, 0
      %v365 = vsel %vm345, 1, 0
      %v366 = vsel %vm346, 1, 0
      %v367 = vsel %vm347, 1, 0
      %v368 = vsel %vm348, 1, 0
      %v369 = vsel %vm349, 1, 0
      %v370 = vsel %vm350, 1, 0
      %v371 = vsel %vm351, 1, 0
      %v372 = vsel %vm352, 1, 0
      %v373 = vsel %vm353, 1, 0
      %v374 = vsel %vm354, 1, 0
      %v375 = vsel %vm355, 1, 0
      %v376 = vsel %vm356, 1, 0
      %v377 = vsel %vm357, 1, 0
      %v378 = vsel %vm358, 1, 0
      %v379 = vsel %vm359, 1, 0
      %v380 = vsel %vm360, 1, 0
      %v381 = vsel %vm361, 1, 0
      %v382 = vsel %vm362, 1, 0
      %v383 = vcvt.s32.f32 %v363
      %v384 = vcvt.s32.f32 %v364
      %v385 = vcvt.s32.f32 %v365
      %v386 = vcvt.s32.f32 %v366
      %v387 = vcvt.s32.f32 %v367
      %v388 = vcvt.s32.f32 %v368
      %v389 = vcvt.s32.f32 %v369
      %v390 = vcvt.s32.f32 %v370
      %v391 = vcvt.s32.f32 %v371
      %v392 = vcvt.s32.f32 %v372
      %v393 = vcvt.s32.f32 %v373
      %v394 = vcvt.s32.f32 %v374
      %v395 = vcvt.s32.f32 %v375
      %v396 = vcvt.s32.f32 %v376
      %v397 = vcvt.s32.f32 %v377
      %v398 = vcvt.s32.f32 %v378
      %v399 = vcvt.s32.f32 %v379
      %v400 = vcvt.s32.f32 %v380
      %v401 = vcvt.s32.f32 %v381
      %v402 = vcvt.s32.f32 %v382
      %v403 = vld [vmem:[#allocation2] sm:$0xff]
      %v404 = vld [vmem:[#allocation2 + $0x8] sm:$0xff]
      %v405 = vld [vmem:[#allocation2 + $0x10] sm:$0xff]
      %v406 = vld [vmem:[#allocation2 + $0x18] sm:$0xff]
      %v407 = vld [vmem:[#allocation2 + $0x20] sm:$0xff]
      %v408 = vld [vmem:[#allocation2 + $0x28] sm:$0xff]
      %v409 = vld [vmem:[#allocation2 + $0x30] sm:$0xff]
      %v410 = vld [vmem:[#allocation2 + $0x38] sm:$0xff]
      %v411 = vld [vmem:[#allocation2 + $0x40] sm:$0xff]
      %v412 = vld [vmem:[#allocation2 + $0x48] sm:$0xff]
      %v413 = vld [vmem:[#allocation2 + $0x50] sm:$0xff]
      %v414 = vld [vmem:[#allocation2 + $0x58] sm:$0xff]
      %v415 = vld [vmem:[#allocation2 + $0x60] sm:$0xff]
      %v416 = vld [vmem:[#allocation2 + $0x68] sm:$0xff]
      %v417 = vld [vmem:[#allocation2 + $0x70] sm:$0xff]
      %v418 = vld [vmem:[#allocation2 + $0x78] sm:$0xff]
      %v419 = vld [vmem:[#allocation2 + $0x80] sm:$0xf]
      %v420 = vld [vmem:[#allocation2 + $0x88] sm:$0xf]
      %v421 = vld [vmem:[#allocation2 + $0x90] sm:$0xf]
      %v422 = vld [vmem:[#allocation2 + $0x98] sm:$0xf]
      %v423 = vmul.f32 %v300, %v383
      %v424 = vmul.f32 %v301, %v384
      %v425 = vmul.f32 %v302, %v385
      %v426 = vmul.f32 %v303, %v386
      %v427 = vmul.f32 %v304, %v387
      %v428 = vmul.f32 %v305, %v388
      %v429 = vmul.f32 %v306, %v389
      %v430 = vmul.f32 %v307, %v390
      %v431 = vmul.f32 %v308, %v391
      %v432 = vmul.f32 %v309, %v392
      %v433 = vmul.f32 %v310, %v393
      %v434 = vmul.f32 %v311, %v394
      %v435 = vmul.f32 %v312, %v395
      %v436 = vmul.f32 %v313, %v396
      %v437 = vmul.f32 %v314, %v397
      %v438 = vmul.f32 %v315, %v398
      %v439 = vmul.f32 %v316, %v399
      %v440 = vmul.f32 %v317, %v400
      %v441 = vmul.f32 %v318, %v401
      %v442 = vmul.f32 %v319, %v402
      %v443 = vadd.f32 %v403, %v423
      %v444 = vadd.f32 %v404, %v424
      %v445 = vadd.f32 %v405, %v425
      %v446 = vadd.f32 %v406, %v426
      %v447 = vadd.f32 %v407, %v427
      %v448 = vadd.f32 %v408, %v428
      %v449 = vadd.f32 %v409, %v429
      %v450 = vadd.f32 %v410, %v430
      %v451 = vadd.f32 %v411, %v431
      %v452 = vadd.f32 %v412, %v432
      %v453 = vadd.f32 %v413, %v433
      %v454 = vadd.f32 %v414, %v434
      %v455 = vadd.f32 %v415, %v435
      %v456 = vadd.f32 %v416, %v436
      %v457 = vadd.f32 %v417, %v437
      %v458 = vadd.f32 %v418, %v438
      %v459 = vadd.f32 %v419, %v439
      %v460 = vadd.f32 %v420, %v440
      %v461 = vadd.f32 %v421, %v441
      %v462 = vadd.f32 %v422, %v442
      %463 = vst [vmem:[#allocation2] sm:$0xff] %v443
      %464 = vst [vmem:[#allocation2 + $0x8] sm:$0xff] %v444
      %465 = vst [vmem:[#allocation2 + $0x10] sm:$0xff] %v445
      %466 = vst [vmem:[#allocation2 + $0x18] sm:$0xff] %v446
      %467 = vst [vmem:[#allocation2 + $0x20] sm:$0xff] %v447
      %468 = vst [vmem:[#allocation2 + $0x28] sm:$0xff] %v448
      %469 = vst [vmem:[#allocation2 + $0x30] sm:$0xff] %v449
      %470 = vst [vmem:[#allocation2 + $0x38] sm:$0xff] %v450
      %471 = vst [vmem:[#allocation2 + $0x40] sm:$0xff] %v451
      %472 = vst [vmem:[#allocation2 + $0x48] sm:$0xff] %v452
      %473 = vst [vmem:[#allocation2 + $0x50] sm:$0xff] %v453
      %474 = vst [vmem:[#allocation2 + $0x58] sm:$0xff] %v454
      %475 = vst [vmem:[#allocation2 + $0x60] sm:$0xff] %v455
      %476 = vst [vmem:[#allocation2 + $0x68] sm:$0xff] %v456
      %477 = vst [vmem:[#allocation2 + $0x70] sm:$0xff] %v457
      %478 = vst [vmem:[#allocation2 + $0x78] sm:$0xff] %v458
      %479 = vst [vmem:[#allocation2 + $0x80] sm:$0xf] %v459
      %480 = vst [vmem:[#allocation2 + $0x88] sm:$0xf] %v460
      %481 = vst [vmem:[#allocation2 + $0x90] sm:$0xf] %v461
      %482 = vst [vmem:[#allocation2 + $0x98] sm:$0xf] %v462
      %v483 = vld [vmem:[#allocation3] sm:$0xff]
      %v484 = vld [vmem:[#allocation3 + $0x8] sm:$0xff]
      %v485 = vld [vmem:[#allocation3 + $0x10] sm:$0xff]
      %v486 = vld [vmem:[#allocation3 + $0x18] sm:$0xff]
      %v487 = vld [vmem:[#allocation3 + $0x20] sm:$0xff]
      %v488 = vld [vmem:[#allocation3 + $0x28] sm:$0xff]
      %v489 = vld [vmem:[#allocation3 + $0x30] sm:$0xff]
      %v490 = vld [vmem:[#allocation3 + $0x38] sm:$0xff]
      %v491 = vld [vmem:[#allocation3 + $0x40] sm:$0xff]
      %v492 = vld [vmem:[#allocation3 + $0x48] sm:$0xff]
      %v493 = vld [vmem:[#allocation3 + $0x50] sm:$0xff]
      %v494 = vld [vmem:[#allocation3 + $0x58] sm:$0xff]
      %v495 = vld [vmem:[#allocation3 + $0x60] sm:$0xff]
      %v496 = vld [vmem:[#allocation3 + $0x68] sm:$0xff]
      %v497 = vld [vmem:[#allocation3 + $0x70] sm:$0xff]
      %v498 = vld [vmem:[#allocation3 + $0x78] sm:$0xff]
      %v499 = vld [vmem:[#allocation3 + $0x80] sm:$0xf]
      %v500 = vld [vmem:[#allocation3 + $0x88] sm:$0xf]
      %v501 = vld [vmem:[#allocation3 + $0x90] sm:$0xf]
      %v502 = vld [vmem:[#allocation3 + $0x98] sm:$0xf]
      %v503 = vmul.f32 %v300, %v300
      %v504 = vmul.f32 %v301, %v301
      %v505 = vmul.f32 %v302, %v302
      %v506 = vmul.f32 %v303, %v303
      %v507 = vmul.f32 %v304, %v304
      %v508 = vmul.f32 %v305, %v305
      %v509 = vmul.f32 %v306, %v306
      %v510 = vmul.f32 %v307, %v307
      %v511 = vmul.f32 %v308, %v308
      %v512 = vmul.f32 %v309, %v309
      %v513 = vmul.f32 %v310, %v310
      %v514 = vmul.f32 %v311, %v311
      %v515 = vmul.f32 %v312, %v312
      %v516 = vmul.f32 %v313, %v313
      %v517 = vmul.f32 %v314, %v314
      %v518 = vmul.f32 %v315, %v315
      %v519 = vmul.f32 %v316, %v316
      %v520 = vmul.f32 %v317, %v317
      %v521 = vmul.f32 %v318, %v318
      %v522 = vmul.f32 %v319, %v319
      %v523 = vadd.f32 %v483, %v503
      %v524 = vadd.f32 %v484, %v504
      %v525 = vadd.f32 %v485, %v505
      %v526 = vadd.f32 %v486, %v506
      %v527 = vadd.f32 %v487, %v507
      %v528 = vadd.f32 %v488, %v508
      %v529 = vadd.f32 %v489, %v509
      %v530 = vadd.f32 %v490, %v510
      %v531 = vadd.f32 %v491, %v511
      %v532 = vadd.f32 %v492, %v512
      %v533 = vadd.f32 %v493, %v513
      %v534 = vadd.f32 %v494, %v514
      %v535 = vadd.f32 %v495, %v515
      %v536 = vadd.f32 %v496, %v516
      %v537 = vadd.f32 %v497, %v517
      %v538 = vadd.f32 %v498, %v518
      %v539 = vadd.f32 %v499, %v519
      %v540 = vadd.f32 %v500, %v520
      %v541 = vadd.f32 %v501, %v521
      %v542 = vadd.f32 %v502, %v522
      %543 = vst [vmem:[#allocation3] sm:$0xff] %v523
      %544 = vst [vmem:[#allocation3 + $0x8] sm:$0xff] %v524
      %545 = vst [vmem:[#allocation3 + $0x10] sm:$0xff] %v525
      %546 = vst [vmem:[#allocation3 + $0x18] sm:$0xff] %v526
      %547 = vst [vmem:[#allocation3 + $0x20] sm:$0xff] %v527
      %548 = vst [vmem:[#allocation3 + $0x28] sm:$0xff] %v528
      %549 = vst [vmem:[#allocation3 + $0x30] sm:$0xff] %v529
      %550 = vst [vmem:[#allocation3 + $0x38] sm:$0xff] %v530
      %551 = vst [vmem:[#allocation3 + $0x40] sm:$0xff] %v531
      %552 = vst [vmem:[#allocation3 + $0x48] sm:$0xff] %v532
      %553 = vst [vmem:[#allocation3 + $0x50] sm:$0xff] %v533
      %554 = vst [vmem:[#allocation3 + $0x58] sm:$0xff] %v534
      %555 = vst [vmem:[#allocation3 + $0x60] sm:$0xff] %v535
      %556 = vst [vmem:[#allocation3 + $0x68] sm:$0xff] %v536
      %557 = vst [vmem:[#allocation3 + $0x70] sm:$0xff] %v537
      %558 = vst [vmem:[#allocation3 + $0x78] sm:$0xff] %v538
      %559 = vst [vmem:[#allocation3 + $0x80] sm:$0xf] %v539
      %560 = vst [vmem:[#allocation3 + $0x88] sm:$0xf] %v540
      %561 = vst [vmem:[#allocation3 + $0x90] sm:$0xf] %v541
      %562 = vst [vmem:[#allocation3 + $0x98] sm:$0xf] %v542
      %v563 = vld [vmem:[#allocation4] sm:$0xff]
      %v564 = vld [vmem:[#allocation4 + $0x8] sm:$0xff]
      %v565 = vld [vmem:[#allocation4 + $0x10] sm:$0xff]
      %v566 = vld [vmem:[#allocation4 + $0x18] sm:$0xff]
      %v567 = vld [vmem:[#allocation4 + $0x20] sm:$0xff]
      %v568 = vld [vmem:[#allocation4 + $0x28] sm:$0xff]
      %v569 = vld [vmem:[#allocation4 + $0x30] sm:$0xff]
      %v570 = vld [vmem:[#allocation4 + $0x38] sm:$0xff]
      %v571 = vld [vmem:[#allocation4 + $0x40] sm:$0xff]
      %v572 = vld [vmem:[#allocation4 + $0x48] sm:$0xff]
      %v573 = vld [vmem:[#allocation4 + $0x50] sm:$0xff]
      %v574 = vld [vmem:[#allocation4 + $0x58] sm:$0xff]
      %v575 = vld [vmem:[#allocation4 + $0x60] sm:$0xff]
      %v576 = vld [vmem:[#allocation4 + $0x68] sm:$0xff]
      %v577 = vld [vmem:[#allocation4 + $0x70] sm:$0xff]
      %v578 = vld [vmem:[#allocation4 + $0x78] sm:$0xff]
      %v579 = vld [vmem:[#allocation4 + $0x80] sm:$0xf]
      %v580 = vld [vmem:[#allocation4 + $0x88] sm:$0xf]
      %v581 = vld [vmem:[#allocation4 + $0x90] sm:$0xf]
      %v582 = vld [vmem:[#allocation4 + $0x98] sm:$0xf]
      %v583 = vadd.f32 %v563, %v383
      %v584 = vadd.f32 %v564, %v384
      %v585 = vadd.f32 %v565, %v385
      %v586 = vadd.f32 %v566, %v386
      %v587 = vadd.f32 %v567, %v387
      %v588 = vadd.f32 %v568, %v388
      %v589 = vadd.f32 %v569, %v389
      %v590 = vadd.f32 %v570, %v390
      %v591 = vadd.f32 %v571, %v391
      %v592 = vadd.f32 %v572, %v392
      %v593 = vadd.f32 %v573, %v393
      %v594 = vadd.f32 %v574, %v394
      %v595 = vadd.f32 %v575, %v395
      %v596 = vadd.f32 %v576, %v396
      %v597 = vadd.f32 %v577, %v397
      %v598 = vadd.f32 %v578, %v398
      %v599 = vadd.f32 %v579, %v399
      %v600 = vadd.f32 %v580, %v400
      %v601 = vadd.f32 %v581, %v401
      %v602 = vadd.f32 %v582, %v402
      %603 = vst [vmem:[#allocation4] sm:$0xff] %v583
      %604 = vst [vmem:[#allocation4 + $0x8] sm:$0xff] %v584
      %605 = vst [vmem:[#allocation4 + $0x10] sm:$0xff] %v585
      %606 = vst [vmem:[#allocation4 + $0x18] sm:$0xff] %v586
      %607 = vst [vmem:[#allocation4 + $0x20] sm:$0xff] %v587
      %608 = vst [vmem:[#allocation4 + $0x28] sm:$0xff] %v588
      %609 = vst [vmem:[#allocation4 + $0x30] sm:$0xff] %v589
      %610 = vst [vmem:[#allocation4 + $0x38] sm:$0xff] %v590
      %611 = vst [vmem:[#allocation4 + $0x40] sm:$0xff] %v591
      %612 = vst [vmem:[#allocation4 + $0x48] sm:$0xff] %v592
      %613 = vst [vmem:[#allocation4 + $0x50] sm:$0xff] %v593
      %614 = vst [vmem:[#allocation4 + $0x58] sm:$0xff] %v594
      %615 = vst [vmem:[#allocation4 + $0x60] sm:$0xff] %v595
      %616 = vst [vmem:[#allocation4 + $0x68] sm:$0xff] %v596
      %617 = vst [vmem:[#allocation4 + $0x70] sm:$0xff] %v597
      %618 = vst [vmem:[#allocation4 + $0x78] sm:$0xff] %v598
      %619 = vst [vmem:[#allocation4 + $0x80] sm:$0xf] %v599
      %620 = vst [vmem:[#allocation4 + $0x88] sm:$0xf] %v600
      %621 = vst [vmem:[#allocation4 + $0x90] sm:$0xf] %v601
      %622 = vst [vmem:[#allocation4 + $0x98] sm:$0xf] %v602
      // Predicated region
      $region33: #{dice_loss.1} parent=27 // pred_check
        %p623 = pneg %p236
      $region34: #{dice_loss.1} parent=27 // pred_check_branch
        %625 = sbr.rel (%p623) target = $region36
      $region35: #{dice_loss.1} parent=27 // pred_region
        %v626 = vld [vmem:[#allocation2] sm:$0xff]
        %v627 = vld [vmem:[#allocation2 + $0x8] sm:$0xff]
        %v628 = vld [vmem:[#allocation2 + $0x10] sm:$0xff]
        %v629 = vld [vmem:[#allocation2 + $0x18] sm:$0xff]
        %v630 = vld [vmem:[#allocation2 + $0x20] sm:$0xff]
        %v631 = vld [vmem:[#allocation2 + $0x28] sm:$0xff]
        %v632 = vld [vmem:[#allocation2 + $0x30] sm:$0xff]
        %v633 = vld [vmem:[#allocation2 + $0x38] sm:$0xff]
        %v634 = vld [vmem:[#allocation2 + $0x40] sm:$0xff]
        %v635 = vld [vmem:[#allocation2 + $0x48] sm:$0xff]
        %v636 = vld [vmem:[#allocation2 + $0x50] sm:$0xff]
        %v637 = vld [vmem:[#allocation2 + $0x58] sm:$0xff]
        %v638 = vld [vmem:[#allocation2 + $0x60] sm:$0xff]
        %v639 = vld [vmem:[#allocation2 + $0x68] sm:$0xff]
        %v640 = vld [vmem:[#allocation2 + $0x70] sm:$0xff]
        %v641 = vld [vmem:[#allocation2 + $0x78] sm:$0xff]
        %v642 = vld [vmem:[#allocation2 + $0x80] sm:$0xf]
        %v643 = vld [vmem:[#allocation2 + $0x88] sm:$0xf]
        %v644 = vld [vmem:[#allocation2 + $0x90] sm:$0xf]
        %v645 = vld [vmem:[#allocation2 + $0x98] sm:$0xf]
        %v646 = vadd.f32 %v626, %v627
        %v647 = vadd.f32 %v646, %v628
        %v648 = vadd.f32 %v647, %v629
        %649 = vadd.xlane.f32.xlu0 %v648
        %v650 = vpop.xlane.xlu0 %649
        %v651 = vadd.f32 %v630, %v631
        %v652 = vadd.f32 %v651, %v632
        %v653 = vadd.f32 %v652, %v633
        %654 = vadd.xlane.f32.xlu0 %v653
        %v655 = vpop.xlane.xlu0 %654
        %v656 = vadd.f32 %v634, %v635
        %v657 = vadd.f32 %v656, %v636
        %v658 = vadd.f32 %v657, %v637
        %659 = vadd.xlane.f32.xlu0 %v658
        %v660 = vpop.xlane.xlu0 %659
        %v661 = vadd.f32 %v638, %v639
        %v662 = vadd.f32 %v661, %v640
        %v663 = vadd.f32 %v662, %v641
        %664 = vadd.xlane.f32.xlu0 %v663
        %v665 = vpop.xlane.xlu0 %664
        %vm666 = vcmask 1043456
        %v667 = vsel %vm666, %v642, 0.0
        %v668 = vsel %vm666, %v643, 0.0
        %v669 = vadd.f32 %v667, %v668
        %v670 = vsel %vm666, %v644, 0.0
        %v671 = vadd.f32 %v669, %v670
        %v672 = vsel %vm666, %v645, 0.0
        %v673 = vadd.f32 %v671, %v672
        %674 = vadd.xlane.f32.xlu0 %v673
        %v675 = vpop.xlane.xlu0 %674
        %vm676 = vcmask 7168
        %677 = vst.msk [vmem:[%s235] sm:$0xff] %vm676, %v650
        %678 = vst.msk [vmem:[%s235 + $0x8] sm:$0xff] %vm676, %v655
        %679 = vst.msk [vmem:[%s235 + $0x10] sm:$0xff] %vm676, %v660
        %680 = vst.msk [vmem:[%s235 + $0x18] sm:$0xff] %vm676, %v665
        %vm681 = vcmask 3072
        %682 = vst.msk [vmem:[%s235 + $0x20] sm:$0xf] %vm681, %v675
        %v683 = vld [vmem:[#allocation3] sm:$0xff]
        %v684 = vld [vmem:[#allocation3 + $0x8] sm:$0xff]
        %v685 = vld [vmem:[#allocation3 + $0x10] sm:$0xff]
        %v686 = vld [vmem:[#allocation3 + $0x18] sm:$0xff]
        %v687 = vld [vmem:[#allocation3 + $0x20] sm:$0xff]
        %v688 = vld [vmem:[#allocation3 + $0x28] sm:$0xff]
        %v689 = vld [vmem:[#allocation3 + $0x30] sm:$0xff]
        %v690 = vld [vmem:[#allocation3 + $0x38] sm:$0xff]
        %v691 = vld [vmem:[#allocation3 + $0x40] sm:$0xff]
        %v692 = vld [vmem:[#allocation3 + $0x48] sm:$0xff]
        %v693 = vld [vmem:[#allocation3 + $0x50] sm:$0xff]
        %v694 = vld [vmem:[#allocation3 + $0x58] sm:$0xff]
        %v695 = vld [vmem:[#allocation3 + $0x60] sm:$0xff]
        %v696 = vld [vmem:[#allocation3 + $0x68] sm:$0xff]
        %v697 = vld [vmem:[#allocation3 + $0x70] sm:$0xff]
        %v698 = vld [vmem:[#allocation3 + $0x78] sm:$0xff]
        %v699 = vld [vmem:[#allocation3 + $0x80] sm:$0xf]
        %v700 = vld [vmem:[#allocation3 + $0x88] sm:$0xf]
        %v701 = vld [vmem:[#allocation3 + $0x90] sm:$0xf]
        %v702 = vld [vmem:[#allocation3 + $0x98] sm:$0xf]
        %v703 = vadd.f32 %v683, %v684
        %v704 = vadd.f32 %v703, %v685
        %v705 = vadd.f32 %v704, %v686
        %706 = vadd.xlane.f32.xlu0 %v705
        %v707 = vpop.xlane.xlu0 %706
        %v708 = vadd.f32 %v687, %v688
        %v709 = vadd.f32 %v708, %v689
        %v710 = vadd.f32 %v709, %v690
        %711 = vadd.xlane.f32.xlu0 %v710
        %v712 = vpop.xlane.xlu0 %711
        %v713 = vadd.f32 %v691, %v692
        %v714 = vadd.f32 %v713, %v693
        %v715 = vadd.f32 %v714, %v694
        %716 = vadd.xlane.f32.xlu0 %v715
        %v717 = vpop.xlane.xlu0 %716
        %v718 = vadd.f32 %v695, %v696
        %v719 = vadd.f32 %v718, %v697
        %v720 = vadd.f32 %v719, %v698
        %721 = vadd.xlane.f32.xlu0 %v720
        %v722 = vpop.xlane.xlu0 %721
        %v723 = vsel %vm666, %v699, 0.0
        %v724 = vsel %vm666, %v700, 0.0
        %v725 = vadd.f32 %v723, %v724
        %v726 = vsel %vm666, %v701, 0.0
        %v727 = vadd.f32 %v725, %v726
        %v728 = vsel %vm666, %v702, 0.0
        %v729 = vadd.f32 %v727, %v728
        %730 = vadd.xlane.f32.xlu0 %v729
        %v731 = vpop.xlane.xlu0 %730
        %vm732 = vcmask 15368
        %733 = vst.msk [vmem:[%s235] sm:$0xff] %vm732, %v707
        %734 = vst.msk [vmem:[%s235 + $0x8] sm:$0xff] %vm732, %v712
        %735 = vst.msk [vmem:[%s235 + $0x10] sm:$0xff] %vm732, %v717
        %736 = vst.msk [vmem:[%s235 + $0x18] sm:$0xff] %vm732, %v722
        %vm737 = vcmask 11272
        %738 = vst.msk [vmem:[%s235 + $0x20] sm:$0xf] %vm737, %v731
        %v739 = vld [vmem:[#allocation4] sm:$0xff]
        %v740 = vld [vmem:[#allocation4 + $0x8] sm:$0xff]
        %v741 = vld [vmem:[#allocation4 + $0x10] sm:$0xff]
        %v742 = vld [vmem:[#allocation4 + $0x18] sm:$0xff]
        %v743 = vld [vmem:[#allocation4 + $0x20] sm:$0xff]
        %v744 = vld [vmem:[#allocation4 + $0x28] sm:$0xff]
        %v745 = vld [vmem:[#allocation4 + $0x30] sm:$0xff]
        %v746 = vld [vmem:[#allocation4 + $0x38] sm:$0xff]
        %v747 = vld [vmem:[#allocation4 + $0x40] sm:$0xff]
        %v748 = vld [vmem:[#allocation4 + $0x48] sm:$0xff]
        %v749 = vld [vmem:[#allocation4 + $0x50] sm:$0xff]
        %v750 = vld [vmem:[#allocation4 + $0x58] sm:$0xff]
        %v751 = vld [vmem:[#allocation4 + $0x60] sm:$0xff]
        %v752 = vld [vmem:[#allocation4 + $0x68] sm:$0xff]
        %v753 = vld [vmem:[#allocation4 + $0x70] sm:$0xff]
        %v754 = vld [vmem:[#allocation4 + $0x78] sm:$0xff]
        %v755 = vld [vmem:[#allocation4 + $0x80] sm:$0xf]
        %v756 = vld [vmem:[#allocation4 + $0x88] sm:$0xf]
        %v757 = vld [vmem:[#allocation4 + $0x90] sm:$0xf]
        %v758 = vld [vmem:[#allocation4 + $0x98] sm:$0xf]
        %v759 = vadd.f32 %v739, %v740
        %v760 = vadd.f32 %v759, %v741
        %v761 = vadd.f32 %v760, %v742
        %762 = vadd.xlane.f32.xlu0 %v761
        %v763 = vpop.xlane.xlu0 %762
        %v764 = vadd.f32 %v743, %v744
        %v765 = vadd.f32 %v764, %v745
        %v766 = vadd.f32 %v765, %v746
        %767 = vadd.xlane.f32.xlu0 %v766
        %v768 = vpop.xlane.xlu0 %767
        %v769 = vadd.f32 %v747, %v748
        %v770 = vadd.f32 %v769, %v749
        %v771 = vadd.f32 %v770, %v750
        %772 = vadd.xlane.f32.xlu0 %v771
        %v773 = vpop.xlane.xlu0 %772
        %v774 = vadd.f32 %v751, %v752
        %v775 = vadd.f32 %v774, %v753
        %v776 = vadd.f32 %v775, %v754
        %777 = vadd.xlane.f32.xlu0 %v776
        %v778 = vpop.xlane.xlu0 %777
        %v779 = vsel %vm666, %v755, 0.0
        %v780 = vsel %vm666, %v756, 0.0
        %v781 = vadd.f32 %v779, %v780
        %v782 = vsel %vm666, %v757, 0.0
        %v783 = vadd.f32 %v781, %v782
        %v784 = vsel %vm666, %v758, 0.0
        %v785 = vadd.f32 %v783, %v784
        %786 = vadd.xlane.f32.xlu0 %v785
        %v787 = vpop.xlane.xlu0 %786
        %vm788 = vcmask 23568
        %789 = vst.msk [vmem:[%s235] sm:$0xff] %vm788, %v763
        %790 = vst.msk [vmem:[%s235 + $0x8] sm:$0xff] %vm788, %v768
        %791 = vst.msk [vmem:[%s235 + $0x10] sm:$0xff] %vm788, %v773
        %792 = vst.msk [vmem:[%s235 + $0x18] sm:$0xff] %vm788, %v778
        %vm793 = vcmask 19472
        %794 = vst.msk [vmem:[%s235 + $0x20] sm:$0xf] %vm793, %v787
      $region36: #{dice_loss.1} parent=27 // pred_fallthru
        _
      %p795 = scmp.lt.s32.totalorder %s18, 1
      %s796 = scalar_select %p795, %s18, 1
      %p797 = scmp.lt.s32.totalorder %s19, 0
      %s798 = scalar_select %p797, %s19, 0
      %s799 = smul.addr %s798, 5
      %s800 = smul.addr %s796, 5
      %s801 = sadd.s32 %s799, %s800
      %s802 = smul.addr %s801, 8
      %s803 = scalar_lea.vmem %s2, %s802
      // Predicated region
      $region37: #{dice_loss.1} parent=27 // pred_check
        %p804 = pneg %p112
      $region38: #{dice_loss.1} parent=27 // pred_check_branch
        %806 = sbr.rel (%p804) target = $region40
      $region39: #{dice_loss.1} parent=27 // pred_region
        _
      $region40: #{dice_loss.1} parent=27 // pred_fallthru
        _
    $region28: #{dice_loss.1} parent=5 // pred_fallthru
      _
    %p807 = scmp.le.s32.totalorder 2, %s8
    // Predicated region
    $region41: #{dice_loss.1} parent=5 // pred_check
      %p808 = pneg %p807
    $region42: #{dice_loss.1} parent=5 // pred_check_branch
      %810 = sbr.rel (%p808) target = $region44
    $region43: #{dice_loss.1} parent=5 // pred_region
      %s811 = ssub.s32 %s8, 2
      // Predicated region
      $region45: #{dice_loss.1} parent=43 // pred_check
        %p812 = pneg %p118
      $region46: #{dice_loss.1} parent=43 // pred_check_branch
        %814 = sbr.rel (%p812) target = $region48
      $region47: #{dice_loss.1} parent=43 // pred_region
        %p815 = scmp.lt.s32.totalorder %s21, 1
        %s816 = scalar_select %p815, %s21, 1
        %p817 = scmp.lt.s32.totalorder %s22, 0
        %s818 = scalar_select %p817, %s22, 0
        %s819 = smul.addr %s818, 5
        %s820 = smul.addr %s816, 5
        %s821 = sadd.s32 %s819, %s820
        %s822 = smul.addr %s821, 8
        %s823 = scalar_lea.vmem %s2, %s822
      $region48: #{dice_loss.1} parent=43 // pred_fallthru
        _
    $region44: #{dice_loss.1} parent=5 // pred_fallthru
      _
  $region6: #{dice_loss.1} parent=0 // loop_footer
    %s12 = sadd.s32 1, %s8
  $region7: #{dice_loss.1} parent=0 // loop_footer_branch
    %7 = sbr.rel target = $region3
  $region8: #{dice_loss.1} parent=0 // loop_exit
    _

</llo_original>
